<compile_context>
chip_gen: v7x
topology: tpu7x:2x2x1
jax: 0.10.0
libtpu: 0.0.40
codegen_flags: <defaults>
</compile_context>

<pallas_src>
import jax
import jax.numpy as jnp
from jax.experimental import pallas as pl
from jax.experimental.pallas import tpu as pltpu


def _round_up(x, m):
    return ((x + m - 1) // m) * m


# ----------------------------------------------------------------------------
# Fused Pallas kernel body
# ----------------------------------------------------------------------------
def _make_fused_head_kernel(block_modes):
    """block_modes: tuple of ("identity" | "fused" | "separate", dout) per block.

    Ref layout after (x_ref, pe_ref):
      per block: identity -> (w1, b1); fused -> (w_cat, b1); separate -> (w1, b1, wp)
      then: gamma, beta, out_w, out_b
      then outputs: feat, feat_norm, logits, logp, prob
    """

    def kernel(x_ref, pe_ref, *refs):
        idx = 0
        h = x_ref[...]                                   # (TM, Din) bf16

        # Residual network (modeled): relu(relu(x@W1 + b1) + x@Wp).
        # TODO(synk): ResidualNetwork internals not provided; structure assumed.
        for mode, dout in block_modes:
            h_bf = h if h.dtype == jnp.bfloat16 else h.astype(jnp.bfloat16)
            if mode == "fused":                          # single (Din, 2*Dout) matmul
                w_ref, b1_ref = refs[idx], refs[idx + 1]
                idx += 2
                y = jnp.dot(h_bf, w_ref[...], preferred_element_type=jnp.float32)
                a = jnp.maximum(y[:, :dout] + b1_ref[...], 0.0)
                skip = y[:, dout:]
            elif mode == "separate":
                w1_ref, b1_ref, wp_ref = refs[idx], refs[idx + 1], refs[idx + 2]
                idx += 3
                a = jnp.maximum(
                    jnp.dot(h_bf, w1_ref[...], preferred_element_type=jnp.float32)
                    + b1_ref[...], 0.0)
                skip = jnp.dot(h_bf, wp_ref[...], preferred_element_type=jnp.float32)
            else:                                        # identity skip (Wp == I)
                w1_ref, b1_ref = refs[idx], refs[idx + 1]
                idx += 2
                a = jnp.maximum(
                    jnp.dot(h_bf, w1_ref[...], preferred_element_type=jnp.float32)
                    + b1_ref[...], 0.0)
                skip = h
            h = jnp.maximum(a + skip, 0.0)

        gamma_ref, beta_ref, wo_ref, bo_ref = refs[idx:idx + 4]
        idx += 4
        feat_ref, featn_ref, logits_ref, logp_ref, prob_ref = refs[idx:idx + 5]

        # LayerNorm(eps=1e-6) over hidden (biased variance), then ReLU + PE.
        mu = jnp.mean(h, axis=-1, keepdims=True)
        xc = h - mu
        var = jnp.mean(xc * xc, axis=-1, keepdims=True)
        xn = xc * jax.lax.rsqrt(var + 1e-6) * gamma_ref[...] + beta_ref[...]
        feat = jnp.maximum(xn, 0.0) + pe_ref[...]        # dropout = identity (eval)
        feat_ref[...] = feat

        # F.normalize(feat, dim=-1), eps = 1e-12 (rsqrt -> EUP slot).
        sq = jnp.sum(feat * feat, axis=-1, keepdims=True)
        featn_ref[...] = (feat * jax.lax.rsqrt(jnp.maximum(sq, 1e-24))
                          ).astype(featn_ref.dtype)

        # gloss_output_layer: Linear(hidden -> padded cls).
        logits = jnp.dot(feat.astype(jnp.bfloat16), wo_ref[...],
                         preferred_element_type=jnp.float32) + bo_ref[...]
        logits_ref[...] = logits.astype(logits_ref.dtype)

        # Numerically stable softmax / log_softmax over classes.
        m = jnp.max(logits, axis=-1, keepdims=True)
        e = jnp.exp(logits - m)
        s = jnp.sum(e, axis=-1, keepdims=True)
        logp_ref[...] = ((logits - m) - jnp.log(s)).astype(logp_ref.dtype)
        prob_ref[...] = (e * pl.reciprocal(s, approx=True)).astype(prob_ref.dtype)

    return kernel


# ----------------------------------------------------------------------------
# Tile selection against a per-device VMEM budget
# ----------------------------------------------------------------------------
def _vmem_budget_bytes():
    # 75% of detected per-core VMEM; conservative fallback (64 MiB, v7x physical)
    # so the same number is safe on v5e/v6e (128 MiB physical).
    cap = 64 * 1024 * 1024
    try:
        cap = int(getattr(pltpu.get_tpu_info(), "vmem_capacity_bytes", cap))
    except Exception:
        pass
    return int(cap * 0.75)


def _choose_row_tile(rows, din, hidden, cls_pad, weight_bytes, out_elt_bytes, budget):
    featn_b, logits_b, logp_b, prob_b = out_elt_bytes
    rows8 = max(8, _round_up(rows, 8))
    per_row = (din * 2 + hidden * 4                       # x (bf16) + PE (f32) in
               + hidden * 4 + hidden * featn_b            # feat + feat_norm out
               + cls_pad * (logits_b + logp_b + prob_b))  # class-wide outputs
    per_row_tmp = 2 * cls_pad * 4 + 2 * hidden * 4        # f32 in-kernel temporaries
    for tm in (512, 384, 256, 128, 64, 32, 16, 8):
        cand = min(tm, rows8)
        est = 2 * cand * per_row + cand * per_row_tmp + 2 * weight_bytes
        if est <= budget:
            return cand
    return 8


# ----------------------------------------------------------------------------
# Parameter construction + positional encoding (plain JAX glue)
# ----------------------------------------------------------------------------
def make_params(key, input_size, residual_blocks, cls_num):
    params = {"residual": []}
    dims = [input_size] + list(residual_blocks)
    for din, dout in zip(dims[:-1], dims[1:]):
        key, k1, k2 = jax.random.split(key, 3)
        w1 = jax.random.normal(k1, (din, dout), jnp.float32) * (1.0 / jnp.sqrt(din))
        b1 = jnp.zeros((dout,), jnp.float32)
        if din == dout:
            wp = None  # identity projection: skip matmul elided in the kernel
        else:
            wp = jax.random.normal(k2, (din, dout), jnp.float32) * (1.0 / jnp.sqrt(din))
        params["residual"].append((w1, b1, wp))
    hidden = residual_blocks[-1]
    params["ln_gamma"] = jnp.ones((hidden,), jnp.float32)
    params["ln_beta"] = jnp.zeros((hidden,), jnp.float32)
    key, kw = jax.random.split(key)
    params["out_w"] = jax.random.normal(kw, (hidden, cls_num), jnp.float32) * (
        1.0 / jnp.sqrt(hidden))
    params["out_b"] = jnp.zeros((cls_num,), jnp.float32)
    return params


def static_positional_encoding(seq_len, dim):
    pos = jnp.arange(seq_len, dtype=jnp.float32)[:, None]
    i = jnp.arange(0, dim, 2, dtype=jnp.float32)[None, :]
    div = jnp.exp(-jnp.log(10000.0) * i / dim)
    pe = jnp.zeros((seq_len, dim), jnp.float32)
    pe = pe.at[:, 0::2].set(jnp.sin(pos * div))
    pe = pe.at[:, 1::2].set(jnp.cos(pos * div))
    return pe


# ----------------------------------------------------------------------------
# VisualHead forward
# ----------------------------------------------------------------------------
def visual_head_forward(params, x, mask=None, valid_len_in=None,
                        low_precision_outputs=True):
    """x: (B, T, input_size); mask accepted for API parity (unused by forward)."""
    b, t, din = x.shape
    if valid_len_in is None:
        valid_len_in = t
    # TODO(synk): valid_len_out passthrough assumed (no temporal downsampling
    # inside the modeled ResidualNetwork).

    hidden = params["ln_gamma"].shape[0]
    cls_num = params["out_w"].shape[1]
    cls_pad = _round_up(cls_num, 128)

    featn_dt = jnp.bfloat16 if low_precision_outputs else jnp.float32
    logits_dt = jnp.bfloat16 if low_precision_outputs else jnp.float32
    prob_dt = jnp.bfloat16 if low_precision_outputs else jnp.float32
    logp_dt = jnp.float32                      # keep log-probs full precision (CTC)

    # Pad class dim to a lane-dense multiple of 128.  Padded classes get a
    # low-precision-safe -30000.0 bias so softmax / log_softmax over the real
    # classes is unchanged; padded columns are sliced off below.
    out_w, out_b = params["out_w"], params["out_b"]
    if cls_pad != cls_num:
        out_w = jnp.pad(out_w, ((0, 0), (0, cls_pad - cls_num)))
        out_b = jnp.concatenate(
            [out_b, jnp.full((cls_pad - cls_num,), -30000.0, jnp.float32)])

    def _const_spec(shape):
        return pl.BlockSpec(shape, lambda i: (0,) * len(shape))

    # Residual-block weight packing: identity skip -> (w1, b1); lane-aligned
    # Dout -> fused (Din, 2*Dout) single matmul; else separate (w1, b1, wp).
    block_modes, weight_args, weight_specs = [], [], []
    weight_bytes = 0
    for (w1, b1, wp) in params["residual"]:
        dout = w1.shape[1]
        if wp is None:
            block_modes.append(("identity", dout))
            packed = [w1.astype(jnp.bfloat16), b1.reshape(1, -1)]
        elif dout % 128 == 0:
            block_modes.append(("fused", dout))
            packed = [jnp.concatenate([w1, wp], axis=1).astype(jnp.bfloat16),
                      b1.reshape(1, -1)]
        else:
            block_modes.append(("separate", dout))
            packed = [w1.astype(jnp.bfloat16), b1.reshape(1, -1),
                      wp.astype(jnp.bfloat16)]
        for a in packed:
            weight_args.append(a)
            weight_specs.append(_const_spec(a.shape))
            weight_bytes += a.size * a.dtype.itemsize

    tail = [params["ln_gamma"].reshape(1, hidden).astype(jnp.float32),
            params["ln_beta"].reshape(1, hidden).astype(jnp.float32),
            out_w.astype(jnp.bfloat16),
            out_b.reshape(1, cls_pad).astype(jnp.float32)]
    for a in tail:
        weight_args.append(a)
        weight_specs.append(_const_spec(a.shape))
        weight_bytes += a.size * a.dtype.itemsize

    # Flatten (B, T) -> rows; pad rows up to a multiple of the chosen tile.
    rows = b * t
    budget = _vmem_budget_bytes()
    out_elt_bytes = (jnp.dtype(featn_dt).itemsize, jnp.dtype(logits_dt).itemsize,
                     jnp.dtype(logp_dt).itemsize, jnp.dtype(prob_dt).itemsize)
    tm = _choose_row_tile(rows, din, hidden, cls_pad, weight_bytes,
                          out_elt_bytes, budget)
    rows_pad = _round_up(rows, tm)

    x_rows = x.reshape(rows, din).astype(jnp.bfloat16)      # bf16 input DMA
    pe = static_positional_encoding(t, hidden)               # (T, H) f32
    pe_rows = jnp.broadcast_to(pe[None], (b, t, hidden)).reshape(rows, hidden)
    if rows_pad != rows:
        x_rows = jnp.pad(x_rows, ((0, rows_pad - rows), (0, 0)))
        pe_rows = jnp.pad(pe_rows, ((0, rows_pad - rows), (0, 0)))

    grid = (rows_pad // tm,)

    def row_spec(last):
        return pl.BlockSpec((tm, last), lambda i: (i, 0))

    in_specs = [row_spec(din), row_spec(hidden)] + weight_specs
    out_shapes = (
        jax.ShapeDtypeStruct((rows_pad, hidden), jnp.float32),   # gloss_feature
        jax.ShapeDtypeStruct((rows_pad, hidden), featn_dt),      # gloss_feature_norm
        jax.ShapeDtypeStruct((rows_pad, cls_pad), logits_dt),    # gloss_logits
        jax.ShapeDtypeStruct((rows_pad, cls_pad), logp_dt),      # log_softmax
        jax.ShapeDtypeStruct((rows_pad, cls_pad), prob_dt),      # softmax
    )
    out_specs = [row_spec(hidden), row_spec(hidden),
                 row_spec(cls_pad), row_spec(cls_pad), row_spec(cls_pad)]

    kernel = _make_fused_head_kernel(tuple(block_modes))

    feat, feat_n, logits, logp, prob = pl.pallas_call(
        kernel,
        out_shape=out_shapes,
        grid=grid,
        in_specs=in_specs,
        out_specs=out_specs,
        compiler_params=pltpu.CompilerParams(
            dimension_semantics=("parallel",),     # row tiles shard across TCs
            vmem_limit_bytes=budget),
    )(x_rows, pe_rows, *weight_args)

    def _unflatten(a, last, keep):
        a = a[:rows].reshape(b, t, last)
        return a if keep == last else a[..., :keep]

    return {
        "gloss_feature": _unflatten(feat, hidden, hidden),
        "gloss_feature_norm": _unflatten(feat_n, hidden, hidden),
        "gloss_logits": _unflatten(logits, cls_pad, cls_num),
        "gloss_probabilities_log": _unflatten(logp, cls_pad, cls_num),
        "gloss_probabilities": _unflatten(prob, cls_pad, cls_num),
        "valid_len_out": valid_len_in,
    }


# ----------------------------------------------------------------------------
# Demo
# ----------------------------------------------------------------------------
if __name__ == "__main__":
    B, T = 2, 8
    INPUT_SIZE = 64
    RESIDUAL_BLOCKS = [128, 128]   # hidden_size = residual_blocks[-1] = 128
    CLS_NUM = 100                  # padded to 128 inside the kernel

    key = jax.random.PRNGKey(0)
    key, kx = jax.random.split(key)
    x = jax.random.normal(kx, (B, T, INPUT_SIZE), jnp.float32)
    mask = jnp.ones((B, T), jnp.bool_)   # unused by forward, kept for API parity

    params = make_params(key, INPUT_SIZE, RESIDUAL_BLOCKS, CLS_NUM)

    out = visual_head_forward(params, x, mask)
    out = jax.tree_util.tree_map(
        lambda a: jax.block_until_ready(a) if isinstance(a, jax.Array) else a, out)

    # light sanity checks (low-precision outputs -> relaxed tolerances)
    hidden = RESIDUAL_BLOCKS[-1]
    f32 = lambda a: jnp.asarray(a, jnp.float32)
    assert out["gloss_feature"].shape == (B, T, hidden)
    assert out["gloss_feature_norm"].shape == (B, T, hidden)
    assert out["gloss_logits"].shape == (B, T, CLS_NUM)
    assert out["gloss_probabilities_log"].shape == (B, T, CLS_NUM)
    assert out["gloss_probabilities"].shape == (B, T, CLS_NUM)
    prob = f32(out["gloss_probabilities"])
    assert jnp.allclose(jnp.sum(prob, axis=-1), 1.0, atol=2e-2)
    assert jnp.allclose(jnp.exp(f32(out["gloss_probabilities_log"])), prob, atol=5e-3)
    assert jnp.allclose(jnp.linalg.norm(f32(out["gloss_feature_norm"]), axis=-1),
                        1.0, atol=2e-2)
    assert out["valid_len_out"] == T

    print("KERNEL_OK")
</pallas_src>

<mosaic_0001>
module attributes {stable_mosaic.version = 11 : i64} {
  func.func @kernel(%arg0: i32, %arg1: memref<16x64xbf16, #tpu.memory_space<vmem>>, %arg2: memref<16x128xf32, #tpu.memory_space<vmem>>, %arg3: memref<64x256xbf16, #tpu.memory_space<vmem>>, %arg4: memref<1x128xf32, #tpu.memory_space<vmem>>, %arg5: memref<128x128xbf16, #tpu.memory_space<vmem>>, %arg6: memref<1x128xf32, #tpu.memory_space<vmem>>, %arg7: memref<1x128xf32, #tpu.memory_space<vmem>>, %arg8: memref<1x128xf32, #tpu.memory_space<vmem>>, %arg9: memref<128x128xbf16, #tpu.memory_space<vmem>>, %arg10: memref<1x128xf32, #tpu.memory_space<vmem>>, %arg11: memref<16x128xf32, #tpu.memory_space<vmem>>, %arg12: memref<16x128xbf16, #tpu.memory_space<vmem>>, %arg13: memref<16x128xbf16, #tpu.memory_space<vmem>>, %arg14: memref<16x128xf32, #tpu.memory_space<vmem>>, %arg15: memref<16x128xbf16, #tpu.memory_space<vmem>>) attributes {dimension_semantics = [#tpu.dimension_semantics<parallel>], iteration_bounds = array<i64: 1>, scalar_prefetch = 0 : i64, scratch_operands = 0 : i64, tpu.core_type = #tpu.core_type<tc>, window_params = [{transform_indices = @transform_0, window_bounds = array<i64: 16, 64>}, {transform_indices = @transform_1, window_bounds = array<i64: 16, 128>}, {pipeline_mode = #tpu.pipeline_mode<synchronous>, transform_indices = @transform_2, window_bounds = array<i64: 64, 256>}, {pipeline_mode = #tpu.pipeline_mode<synchronous>, transform_indices = @transform_3, window_bounds = array<i64: 1, 128>}, {pipeline_mode = #tpu.pipeline_mode<synchronous>, transform_indices = @transform_4, window_bounds = array<i64: 128, 128>}, {pipeline_mode = #tpu.pipeline_mode<synchronous>, transform_indices = @transform_5, window_bounds = array<i64: 1, 128>}, {pipeline_mode = #tpu.pipeline_mode<synchronous>, transform_indices = @transform_6, window_bounds = array<i64: 1, 128>}, {pipeline_mode = #tpu.pipeline_mode<synchronous>, transform_indices = @transform_7, window_bounds = array<i64: 1, 128>}, {pipeline_mode = #tpu.pipeline_mode<synchronous>, transform_indices = @transform_8, window_bounds = array<i64: 128, 128>}, {pipeline_mode = #tpu.pipeline_mode<synchronous>, transform_indices = @transform_9, window_bounds = array<i64: 1, 128>}, {transform_indices = @transform_10, window_bounds = array<i64: 16, 128>}, {transform_indices = @transform_11, window_bounds = array<i64: 16, 128>}, {transform_indices = @transform_12, window_bounds = array<i64: 16, 128>}, {transform_indices = @transform_13, window_bounds = array<i64: 16, 128>}, {transform_indices = @transform_14, window_bounds = array<i64: 16, 128>}]} {
    %c0 = arith.constant 0 : index
    %c0_0 = arith.constant 0 : index
    %0 = vector.load %arg1[%c0, %c0_0] : memref<16x64xbf16, #tpu.memory_space<vmem>>, vector<16x64xbf16>
    %c0_1 = arith.constant 0 : index
    %c0_2 = arith.constant 0 : index
    %1 = vector.load %arg3[%c0_1, %c0_2] : memref<64x256xbf16, #tpu.memory_space<vmem>>, vector<64x256xbf16>
    %cst = arith.constant dense<0.000000e+00> : vector<16x256xf32>
    %2 = tpu.matmul %0, %1, %cst {dimension_numbers = #tpu.dot_dimension_numbers<[1], [0], [0], [1], [0, 0, 1, 1], [], []>} : vector<16x64xbf16>, vector<64x256xbf16>, vector<16x256xf32> -> vector<16x256xf32>
    %3 = vector.extract_strided_slice %2 {offsets = [0, 0], sizes = [16, 128], strides = [1, 1]} : vector<16x256xf32> to vector<16x128xf32>
    %c0_3 = arith.constant 0 : index
    %c0_4 = arith.constant 0 : index
    %4 = vector.load %arg4[%c0_3, %c0_4] : memref<1x128xf32, #tpu.memory_space<vmem>>, vector<1x128xf32>
    %5 = vector.broadcast %4 : vector<1x128xf32> to vector<16x128xf32>
    %6 = arith.addf %3, %5 : vector<16x128xf32>
    %cst_5 = arith.constant 0.000000e+00 : f32
    %7 = vector.broadcast %cst_5 : f32 to vector<16x128xf32>
    %8 = arith.maximumf %6, %7 : vector<16x128xf32>
    %9 = vector.extract_strided_slice %2 {offsets = [0, 128], sizes = [16, 128], strides = [1, 1]} : vector<16x256xf32> to vector<16x128xf32>
    %10 = arith.addf %8, %9 : vector<16x128xf32>
    %cst_6 = arith.constant 0.000000e+00 : f32
    %11 = vector.broadcast %cst_6 : f32 to vector<16x128xf32>
    %12 = arith.maximumf %10, %11 : vector<16x128xf32>
    %13 = arith.truncf %12 : vector<16x128xf32> to vector<16x128xbf16>
    %c0_7 = arith.constant 0 : index
    %c0_8 = arith.constant 0 : index
    %14 = vector.load %arg5[%c0_7, %c0_8] : memref<128x128xbf16, #tpu.memory_space<vmem>>, vector<128x128xbf16>
    %cst_9 = arith.constant dense<0.000000e+00> : vector<16x128xf32>
    %15 = tpu.matmul %13, %14, %cst_9 {dimension_numbers = #tpu.dot_dimension_numbers<[1], [0], [0], [1], [0, 0, 1, 1], [], []>} : vector<16x128xbf16>, vector<128x128xbf16>, vector<16x128xf32> -> vector<16x128xf32>
    %c0_10 = arith.constant 0 : index
    %c0_11 = arith.constant 0 : index
    %16 = vector.load %arg6[%c0_10, %c0_11] : memref<1x128xf32, #tpu.memory_space<vmem>>, vector<1x128xf32>
    %17 = vector.broadcast %16 : vector<1x128xf32> to vector<16x128xf32>
    %18 = arith.addf %15, %17 : vector<16x128xf32>
    %cst_12 = arith.constant 0.000000e+00 : f32
    %19 = vector.broadcast %cst_12 : f32 to vector<16x128xf32>
    %20 = arith.maximumf %18, %19 : vector<16x128xf32>
    %21 = arith.addf %20, %12 : vector<16x128xf32>
    %cst_13 = arith.constant 0.000000e+00 : f32
    %22 = vector.broadcast %cst_13 : f32 to vector<16x128xf32>
    %23 = arith.maximumf %21, %22 : vector<16x128xf32>
    %cst_14 = arith.constant dense<0.000000e+00> : vector<16xf32>
    %24 = vector.multi_reduction <add>, %23, %cst_14 [1] : vector<16x128xf32> to vector<16xf32>
    %25 = vector.shape_cast %24 : vector<16xf32> to vector<16x1xf32>
    %cst_15 = arith.constant 1.280000e+02 : f32
    %26 = vector.broadcast %cst_15 : f32 to vector<16x1xf32>
    %27 = arith.divf %25, %26 : vector<16x1xf32>
    %28 = vector.broadcast %27 : vector<16x1xf32> to vector<16x128xf32>
    %29 = arith.subf %23, %28 : vector<16x128xf32>
    %30 = arith.mulf %29, %29 : vector<16x128xf32>
    %cst_16 = arith.constant dense<0.000000e+00> : vector<16xf32>
    %31 = vector.multi_reduction <add>, %30, %cst_16 [1] : vector<16x128xf32> to vector<16xf32>
    %32 = vector.shape_cast %31 : vector<16xf32> to vector<16x1xf32>
    %cst_17 = arith.constant 1.280000e+02 : f32
    %33 = vector.broadcast %cst_17 : f32 to vector<16x1xf32>
    %34 = arith.divf %32, %33 : vector<16x1xf32>
    %cst_18 = arith.constant 9.99999997E-7 : f32
    %35 = vector.broadcast %cst_18 : f32 to vector<16x1xf32>
    %36 = arith.addf %34, %35 : vector<16x1xf32>
    %37 = math.rsqrt %36 : vector<16x1xf32>
    %38 = vector.broadcast %37 : vector<16x1xf32> to vector<16x128xf32>
    %39 = arith.mulf %29, %38 : vector<16x128xf32>
    %c0_19 = arith.constant 0 : index
    %c0_20 = arith.constant 0 : index
    %40 = vector.load %arg7[%c0_19, %c0_20] : memref<1x128xf32, #tpu.memory_space<vmem>>, vector<1x128xf32>
    %41 = vector.broadcast %40 : vector<1x128xf32> to vector<16x128xf32>
    %42 = arith.mulf %39, %41 : vector<16x128xf32>
    %c0_21 = arith.constant 0 : index
    %c0_22 = arith.constant 0 : index
    %43 = vector.load %arg8[%c0_21, %c0_22] : memref<1x128xf32, #tpu.memory_space<vmem>>, vector<1x128xf32>
    %44 = vector.broadcast %43 : vector<1x128xf32> to vector<16x128xf32>
    %45 = arith.addf %42, %44 : vector<16x128xf32>
    %cst_23 = arith.constant 0.000000e+00 : f32
    %46 = vector.broadcast %cst_23 : f32 to vector<16x128xf32>
    %47 = arith.maximumf %45, %46 : vector<16x128xf32>
    %c0_24 = arith.constant 0 : index
    %c0_25 = arith.constant 0 : index
    %48 = vector.load %arg2[%c0_24, %c0_25] : memref<16x128xf32, #tpu.memory_space<vmem>>, vector<16x128xf32>
    %49 = arith.addf %47, %48 : vector<16x128xf32>
    %c0_26 = arith.constant 0 : index
    %c0_27 = arith.constant 0 : index
    %50 = vector.load %arg11[%c0_26, %c0_27] : memref<16x128xf32, #tpu.memory_space<vmem>>, vector<16x128xf32>
    tpu.vector_store %arg11[%c0_26, %c0_27], %49 {strides = array<i32>} : memref<16x128xf32, #tpu.memory_space<vmem>>, vector<16x128xf32>,
    %51 = arith.mulf %49, %49 : vector<16x128xf32>
    %cst_28 = arith.constant dense<0.000000e+00> : vector<16xf32>
    %52 = vector.multi_reduction <add>, %51, %cst_28 [1] : vector<16x128xf32> to vector<16xf32>
    %53 = vector.shape_cast %52 : vector<16xf32> to vector<16x1xf32>
    %cst_29 = arith.constant 1.000000e-24 : f32
    %54 = vector.broadcast %cst_29 : f32 to vector<16x1xf32>
    %55 = arith.maximumf %53, %54 : vector<16x1xf32>
    %56 = math.rsqrt %55 : vector<16x1xf32>
    %57 = vector.broadcast %56 : vector<16x1xf32> to vector<16x128xf32>
    %58 = arith.mulf %49, %57 : vector<16x128xf32>
    %59 = arith.truncf %58 : vector<16x128xf32> to vector<16x128xbf16>
    %c0_30 = arith.constant 0 : index
    %c0_31 = arith.constant 0 : index
    %60 = vector.load %arg12[%c0_30, %c0_31] : memref<16x128xbf16, #tpu.memory_space<vmem>>, vector<16x128xbf16>
    tpu.vector_store %arg12[%c0_30, %c0_31], %59 {strides = array<i32>} : memref<16x128xbf16, #tpu.memory_space<vmem>>, vector<16x128xbf16>,
    %61 = arith.truncf %49 : vector<16x128xf32> to vector<16x128xbf16>
    %c0_32 = arith.constant 0 : index
    %c0_33 = arith.constant 0 : index
    %62 = vector.load %arg9[%c0_32, %c0_33] : memref<128x128xbf16, #tpu.memory_space<vmem>>, vector<128x128xbf16>
    %cst_34 = arith.constant dense<0.000000e+00> : vector<16x128xf32>
    %63 = tpu.matmul %61, %62, %cst_34 {dimension_numbers = #tpu.dot_dimension_numbers<[1], [0], [0], [1], [0, 0, 1, 1], [], []>} : vector<16x128xbf16>, vector<128x128xbf16>, vector<16x128xf32> -> vector<16x128xf32>
    %c0_35 = arith.constant 0 : index
    %c0_36 = arith.constant 0 : index
    %64 = vector.load %arg10[%c0_35, %c0_36] : memref<1x128xf32, #tpu.memory_space<vmem>>, vector<1x128xf32>
    %65 = vector.broadcast %64 : vector<1x128xf32> to vector<16x128xf32>
    %66 = arith.addf %63, %65 : vector<16x128xf32>
    %67 = arith.truncf %66 : vector<16x128xf32> to vector<16x128xbf16>
    %c0_37 = arith.constant 0 : index
    %c0_38 = arith.constant 0 : index
    %68 = vector.load %arg13[%c0_37, %c0_38] : memref<16x128xbf16, #tpu.memory_space<vmem>>, vector<16x128xbf16>
    tpu.vector_store %arg13[%c0_37, %c0_38], %67 {strides = array<i32>} : memref<16x128xbf16, #tpu.memory_space<vmem>>, vector<16x128xbf16>,
    %cst_39 = arith.constant dense<0xFF800000> : vector<16xf32>
    %69 = vector.multi_reduction <maximumf>, %66, %cst_39 [1] : vector<16x128xf32> to vector<16xf32>
    %70 = vector.shape_cast %69 : vector<16xf32> to vector<16x1xf32>
    %71 = vector.broadcast %70 : vector<16x1xf32> to vector<16x128xf32>
    %72 = arith.subf %66, %71 : vector<16x128xf32>
    %73 = math.exp %72 : vector<16x128xf32>
    %cst_40 = arith.constant dense<0.000000e+00> : vector<16xf32>
    %74 = vector.multi_reduction <add>, %73, %cst_40 [1] : vector<16x128xf32> to vector<16xf32>
    %75 = vector.shape_cast %74 : vector<16xf32> to vector<16x1xf32>
    %76 = vector.broadcast %70 : vector<16x1xf32> to vector<16x128xf32>
    %77 = arith.subf %66, %76 : vector<16x128xf32>
    %78 = math.log %75 : vector<16x1xf32>
    %79 = vector.broadcast %78 : vector<16x1xf32> to vector<16x128xf32>
    %80 = arith.subf %77, %79 : vector<16x128xf32>
    %c0_41 = arith.constant 0 : index
    %c0_42 = arith.constant 0 : index
    %81 = vector.load %arg14[%c0_41, %c0_42] : memref<16x128xf32, #tpu.memory_space<vmem>>, vector<16x128xf32>
    tpu.vector_store %arg14[%c0_41, %c0_42], %80 {strides = array<i32>} : memref<16x128xf32, #tpu.memory_space<vmem>>, vector<16x128xf32>,
    %82 = tpu.reciprocal %75 {approx = true} : vector<16x1xf32> -> vector<16x1xf32>
    %83 = vector.broadcast %82 : vector<16x1xf32> to vector<16x128xf32>
    %84 = arith.mulf %73, %83 : vector<16x128xf32>
    %85 = arith.truncf %84 : vector<16x128xf32> to vector<16x128xbf16>
    %c0_43 = arith.constant 0 : index
    %c0_44 = arith.constant 0 : index
    %86 = vector.load %arg15[%c0_43, %c0_44] : memref<16x128xbf16, #tpu.memory_space<vmem>>, vector<16x128xbf16>
    tpu.vector_store %arg15[%c0_43, %c0_44], %85 {strides = array<i32>} : memref<16x128xbf16, #tpu.memory_space<vmem>>, vector<16x128xbf16>,
    return
  }
  func.func @transform_0(%arg0: i32) -> (i32, i32) {
    %c0_i32 = arith.constant 0 : i32
    %c0_i32_0 = arith.constant 0 : i32
    return %arg0, %c0_i32 : i32, i32
  }
  func.func @transform_1(%arg0: i32) -> (i32, i32) {
    %c0_i32 = arith.constant 0 : i32
    %c0_i32_0 = arith.constant 0 : i32
    return %arg0, %c0_i32 : i32, i32
  }
  func.func @transform_2(%arg0: i32) -> (i32, i32) {
    %c0_i32 = arith.constant 0 : i32
    %c0_i32_0 = arith.constant 0 : i32
    %c0_i32_1 = arith.constant 0 : i32
    return %c0_i32, %c0_i32_0 : i32, i32
  }
  func.func @transform_3(%arg0: i32) -> (i32, i32) {
    %c0_i32 = arith.constant 0 : i32
    %c0_i32_0 = arith.constant 0 : i32
    %c0_i32_1 = arith.constant 0 : i32
    return %c0_i32, %c0_i32_0 : i32, i32
  }
  func.func @transform_4(%arg0: i32) -> (i32, i32) {
    %c0_i32 = arith.constant 0 : i32
    %c0_i32_0 = arith.constant 0 : i32
    %c0_i32_1 = arith.constant 0 : i32
    return %c0_i32, %c0_i32_0 : i32, i32
  }
  func.func @transform_5(%arg0: i32) -> (i32, i32) {
    %c0_i32 = arith.constant 0 : i32
    %c0_i32_0 = arith.constant 0 : i32
    %c0_i32_1 = arith.constant 0 : i32
    return %c0_i32, %c0_i32_0 : i32, i32
  }
  func.func @transform_6(%arg0: i32) -> (i32, i32) {
    %c0_i32 = arith.constant 0 : i32
    %c0_i32_0 = arith.constant 0 : i32
    %c0_i32_1 = arith.constant 0 : i32
    return %c0_i32, %c0_i32_0 : i32, i32
  }
  func.func @transform_7(%arg0: i32) -> (i32, i32) {
    %c0_i32 = arith.constant 0 : i32
    %c0_i32_0 = arith.constant 0 : i32
    %c0_i32_1 = arith.constant 0 : i32
    return %c0_i32, %c0_i32_0 : i32, i32
  }
  func.func @transform_8(%arg0: i32) -> (i32, i32) {
    %c0_i32 = arith.constant 0 : i32
    %c0_i32_0 = arith.constant 0 : i32
    %c0_i32_1 = arith.constant 0 : i32
    return %c0_i32, %c0_i32_0 : i32, i32
  }
  func.func @transform_9(%arg0: i32) -> (i32, i32) {
    %c0_i32 = arith.constant 0 : i32
    %c0_i32_0 = arith.constant 0 : i32
    %c0_i32_1 = arith.constant 0 : i32
    return %c0_i32, %c0_i32_0 : i32, i32
  }
  func.func @transform_10(%arg0: i32) -> (i32, i32) {
    %c0_i32 = arith.constant 0 : i32
    %c0_i32_0 = arith.constant 0 : i32
    return %arg0, %c0_i32 : i32, i32
  }
  func.func @transform_11(%arg0: i32) -> (i32, i32) {
    %c0_i32 = arith.constant 0 : i32
    %c0_i32_0 = arith.constant 0 : i32
    return %arg0, %c0_i32 : i32, i32
  }
  func.func @transform_12(%arg0: i32) -> (i32, i32) {
    %c0_i32 = arith.constant 0 : i32
    %c0_i32_0 = arith.constant 0 : i32
    return %arg0, %c0_i32 : i32, i32
  }
  func.func @transform_13(%arg0: i32) -> (i32, i32) {
    %c0_i32 = arith.constant 0 : i32
    %c0_i32_0 = arith.constant 0 : i32
    return %arg0, %c0_i32 : i32, i32
  }
  func.func @transform_14(%arg0: i32) -> (i32, i32) {
    %c0_i32 = arith.constant 0 : i32
    %c0_i32_0 = arith.constant 0 : i32
    return %arg0, %c0_i32 : i32, i32
  }
}

</mosaic_0001>

<llo_original>
// kernel: tpu_custom_call.1
$region0: #{tpu_custom_call.1}
  #allocation0 [shape = 'u32[]', space=smem, size = 0x4, offset = 0x4, fixed_abs, tag = 'smem constant byte address 0x4 - core index']
  #allocation1 [shape = 'u32[144,128]{1,0:T(1,128)}', space=vmem, size = 0x12000, scoped, tag = 'internal scratch']
  %s0 = inlined_call_operand.hbm [shape: bf16[16,64], index: 0, kind: input, shape index: {}]
  %s1 = inlined_call_operand.hbm [shape: f32[16,128], index: 1, kind: input, shape index: {}]
  %s2 = inlined_call_operand.hbm [shape: bf16[64,256], index: 2, kind: input, shape index: {}]
  %s3 = inlined_call_operand.vmem [shape: f32[1,128], index: 3, kind: input, shape index: {}]
  %s4 = inlined_call_operand.hbm [shape: bf16[128,128], index: 4, kind: input, shape index: {}]
  %s5 = inlined_call_operand.vmem [shape: f32[1,128], index: 5, kind: input, shape index: {}]
  %s6 = inlined_call_operand.vmem [shape: f32[1,128], index: 6, kind: input, shape index: {}]
  %s7 = inlined_call_operand.vmem [shape: f32[1,128], index: 7, kind: input, shape index: {}]
  %s8 = inlined_call_operand.hbm [shape: bf16[128,128], index: 8, kind: input, shape index: {}]
  %s9 = inlined_call_operand.vmem [shape: f32[1,128], index: 9, kind: input, shape index: {}]
  %s10 = inlined_call_operand.hbm [shape: f32[16,128], index: 10, kind: output, shape index: {0}]
  %s11 = inlined_call_operand.hbm [shape: bf16[16,128], index: 11, kind: output, shape index: {1}]
  %s12 = inlined_call_operand.hbm [shape: bf16[16,128], index: 12, kind: output, shape index: {2}]
  %s13 = inlined_call_operand.hbm [shape: f32[16,128], index: 13, kind: output, shape index: {3}]
  %s14 = inlined_call_operand.hbm [shape: bf16[16,128], index: 14, kind: output, shape index: {4}]
  %15 = xla_tuple %s10, %s11, %s12, %s13, %s14
  %s16 = sld [smem:[#allocation0]]
  $region102: #{tpu_custom_call.1} parent=0
    _
  %s18 = ssub.s32 1, %s16
  %s19 = scalar_select 0, %s18, %s16
  $region1: #{tpu_custom_call.1} parent=0
    #allocation2 [shape = 'u8[4096]{0}', space=vmem, size = 0x1000, scoped, tag = 'input window, operand 0, single buffered']
    #allocation3 [shape = 's32[1]{0}', space=sflag, size = 0x4, scoped, tag = 'scoped memory for tpu_custom_call.1']
    #allocation4 [shape = 's32[1]{0}', space=sflag, size = 0x4, scoped, tag = 'scoped memory for tpu_custom_call.1']
    #allocation5 [shape = 'u8[8192]{0}', space=vmem, size = 0x2000, scoped, tag = 'input window, operand 1, single buffered']
    #allocation6 [shape = 's32[1]{0}', space=sflag, size = 0x4, scoped, tag = 'scoped memory for tpu_custom_call.1']
    #allocation7 [shape = 'u8[32768]{0}', space=vmem, size = 0x8000, scoped, tag = 'input window, operand 2, single buffered']
    #allocation8 [shape = 'u8[32768]{0}', space=vmem, size = 0x8000, scoped, tag = 'input window, operand 4, single buffered']
    #allocation9 [shape = 's32[1]{0}', space=sflag, size = 0x4, scoped, tag = 'scoped memory for tpu_custom_call.1']
    #allocation10 [shape = 'u8[32768]{0}', space=vmem, size = 0x8000, scoped, tag = 'input window, operand 8, single buffered']
    #allocation11 [shape = 'u8[8192]{0}', space=vmem, size = 0x2000, scoped, tag = 'output window, operand 0, single buffered']
    #allocation12 [shape = 'u8[4096]{0}', space=vmem, size = 0x1000, scoped, tag = 'output window, operand 1, single buffered']
    #allocation13 [shape = 's32[1]{0}', space=sflag, size = 0x4, scoped, tag = 'scoped memory for tpu_custom_call.1']
    #allocation14 [shape = 'u8[4096]{0}', space=vmem, size = 0x1000, scoped, tag = 'output window, operand 2, single buffered']
    #allocation15 [shape = 'u8[8192]{0}', space=vmem, size = 0x2000, scoped, tag = 'output window, operand 3, single buffered']
    #allocation16 [shape = 's32[1]{0}', space=sflag, size = 0x4, scoped, tag = 'scoped memory for tpu_custom_call.1']
    #allocation17 [shape = 'u8[4096]{0}', space=vmem, size = 0x1000, scoped, tag = 'output window, operand 4, single buffered']
    %20 = vsyncpa [#allocation3], 0
    %21 = vsyncpa [#allocation6], 0
    %22 = vsyncpa [#allocation9], 0
    %23 = vsyncpa [#allocation4], 0
    %24 = vsyncpa [#allocation13], 0
    %25 = vsyncpa [#allocation16], 0
    // Predicated region
    $region2: #{tpu_custom_call.1} parent=1 // pred_check
      _
    $region3: #{tpu_custom_call.1} parent=1 // pred_check_branch
      %27 = sbr.rel (0) target = $region5
    $region4: #{tpu_custom_call.1} parent=1 // pred_region
      %s29 = ssub.s32 128, 128
      %30 = vsyncadd [#allocation3], %s29
      %s31 = sshll.u32 [#allocation2], 4
      %s32 = int_to_ptr.vmem [resolvable:$true] %s31
      %37 = dma.hbm_to_vmem [thread:$0]  %s0, 128, %s32, [#allocation3], 64, 64, 4
    $region5: #{tpu_custom_call.1} parent=1 // pred_fallthru
      _
    // Predicated region
    $region6: #{tpu_custom_call.1} parent=1 // pred_check
      _
    $region7: #{tpu_custom_call.1} parent=1 // pred_check_branch
      %39 = sbr.rel (0) target = $region9
    $region8: #{tpu_custom_call.1} parent=1 // pred_region
      %s41 = ssub.s32 256, 256
      %42 = vsyncadd [#allocation6], %s41
      %s43 = sshll.u32 [#allocation5], 4
      %s44 = int_to_ptr.vmem [resolvable:$true] %s43
      %49 = dma.hbm_to_vmem [thread:$0]  %s1, 256, %s44, [#allocation6], 128, 128, 8
    $region9: #{tpu_custom_call.1} parent=1 // pred_fallthru
      _
    // Predicated region
    $region10: #{tpu_custom_call.1} parent=1 // pred_check
      _
    $region11: #{tpu_custom_call.1} parent=1 // pred_check_branch
      %51 = sbr.rel (0) target = $region13
    $region12: #{tpu_custom_call.1} parent=1 // pred_region
      %s53 = ssub.s32 1024, 1024
      %54 = vsyncadd [#allocation6], %s53
      %s55 = sshll.u32 [#allocation7], 4
      %s56 = int_to_ptr.vmem [resolvable:$true] %s55
      %61 = dma.hbm_to_vmem [thread:$0]  %s2, 1024, %s56, [#allocation6], 128, 128, 8
    $region13: #{tpu_custom_call.1} parent=1 // pred_fallthru
      _
    // Predicated region
    $region14: #{tpu_custom_call.1} parent=1 // pred_check
      _
    $region15: #{tpu_custom_call.1} parent=1 // pred_check_branch
      %63 = sbr.rel (0) target = $region17
    $region16: #{tpu_custom_call.1} parent=1 // pred_region
      _
    $region17: #{tpu_custom_call.1} parent=1 // pred_fallthru
      _
    // Predicated region
    $region18: #{tpu_custom_call.1} parent=1 // pred_check
      _
    $region19: #{tpu_custom_call.1} parent=1 // pred_check_branch
      %65 = sbr.rel (0) target = $region21
    $region20: #{tpu_custom_call.1} parent=1 // pred_region
      %s67 = ssub.s32 1024, 1024
      %68 = vsyncadd [#allocation9], %s67
      %s69 = sshll.u32 [#allocation8], 4
      %s70 = int_to_ptr.vmem [resolvable:$true] %s69
      %75 = dma.hbm_to_vmem [thread:$0]  %s4, 1024, %s70, [#allocation9], 64, 64, 4
    $region21: #{tpu_custom_call.1} parent=1 // pred_fallthru
      _
    // Predicated region
    $region22: #{tpu_custom_call.1} parent=1 // pred_check
      _
    $region23: #{tpu_custom_call.1} parent=1 // pred_check_branch
      %77 = sbr.rel (0) target = $region25
    $region24: #{tpu_custom_call.1} parent=1 // pred_region
      _
    $region25: #{tpu_custom_call.1} parent=1 // pred_fallthru
      _
    // Predicated region
    $region26: #{tpu_custom_call.1} parent=1 // pred_check
      _
    $region27: #{tpu_custom_call.1} parent=1 // pred_check_branch
      %79 = sbr.rel (0) target = $region29
    $region28: #{tpu_custom_call.1} parent=1 // pred_region
      _
    $region29: #{tpu_custom_call.1} parent=1 // pred_fallthru
      _
    // Predicated region
    $region30: #{tpu_custom_call.1} parent=1 // pred_check
      _
    $region31: #{tpu_custom_call.1} parent=1 // pred_check_branch
      %81 = sbr.rel (0) target = $region33
    $region32: #{tpu_custom_call.1} parent=1 // pred_region
      _
    $region33: #{tpu_custom_call.1} parent=1 // pred_fallthru
      _
    // Predicated region
    $region34: #{tpu_custom_call.1} parent=1 // pred_check
      _
    $region35: #{tpu_custom_call.1} parent=1 // pred_check_branch
      %83 = sbr.rel (0) target = $region37
    $region36: #{tpu_custom_call.1} parent=1 // pred_region
      %s85 = ssub.s32 1024, 1024
      %86 = vsyncadd [#allocation9], %s85
      %s87 = sshll.u32 [#allocation10], 4
      %s88 = int_to_ptr.vmem [resolvable:$true] %s87
      %93 = dma.hbm_to_vmem [thread:$0]  %s8, 1024, %s88, [#allocation9], 64, 64, 4
    $region37: #{tpu_custom_call.1} parent=1 // pred_fallthru
      _
    // Predicated region
    $region38: #{tpu_custom_call.1} parent=1 // pred_check
      _
    $region39: #{tpu_custom_call.1} parent=1 // pred_check_branch
      %95 = sbr.rel (0) target = $region41
    $region40: #{tpu_custom_call.1} parent=1 // pred_region
      _
    $region41: #{tpu_custom_call.1} parent=1 // pred_fallthru
      _
    // Predicated region
    $region42: #{tpu_custom_call.1} parent=1 // pred_check
      _
    $region43: #{tpu_custom_call.1} parent=1 // pred_check_branch
      %97 = sbr.rel (0) target = $region45
    $region44: #{tpu_custom_call.1} parent=1 // pred_region
      %98 = dma.done [#allocation3], 128
    $region45: #{tpu_custom_call.1} parent=1 // pred_fallthru
      _
    // Predicated region
    $region46: #{tpu_custom_call.1} parent=1 // pred_check
      _
    $region47: #{tpu_custom_call.1} parent=1 // pred_check_branch
      %100 = sbr.rel (0) target = $region49
    $region48: #{tpu_custom_call.1} parent=1 // pred_region
      %101 = dma.done [#allocation6], 256
    $region49: #{tpu_custom_call.1} parent=1 // pred_fallthru
      _
    // Predicated region
    $region50: #{tpu_custom_call.1} parent=1 // pred_check
      _
    $region51: #{tpu_custom_call.1} parent=1 // pred_check_branch
      %103 = sbr.rel (0) target = $region53
    $region52: #{tpu_custom_call.1} parent=1 // pred_region
      %104 = dma.done [#allocation6], 1024
    $region53: #{tpu_custom_call.1} parent=1 // pred_fallthru
      _
    // Predicated region
    $region54: #{tpu_custom_call.1} parent=1 // pred_check
      _
    $region55: #{tpu_custom_call.1} parent=1 // pred_check_branch
      %106 = sbr.rel (0) target = $region57
    $region56: #{tpu_custom_call.1} parent=1 // pred_region
      %107 = dma.done [#allocation9], 1024
    $region57: #{tpu_custom_call.1} parent=1 // pred_fallthru
      _
    // Predicated region
    $region58: #{tpu_custom_call.1} parent=1 // pred_check
      _
    $region59: #{tpu_custom_call.1} parent=1 // pred_check_branch
      %109 = sbr.rel (0) target = $region61
    $region60: #{tpu_custom_call.1} parent=1 // pred_region
      %110 = dma.done [#allocation9], 1024
    $region61: #{tpu_custom_call.1} parent=1 // pred_fallthru
      _
    %v112 = vld [vmem:[#allocation2] sm:$0xf]
    %v113 = vld [vmem:[#allocation2 + $0x4] sm:$0xf]
    %v114 = vld [vmem:[#allocation7] sm:$0xff]
    %v115 = vld [vmem:[#allocation7 + $0x8] sm:$0xff]
    %v116 = vld [vmem:[#allocation7 + $0x10] sm:$0xff]
    %v117 = vld [vmem:[#allocation7 + $0x18] sm:$0xff]
    %v118 = vld [vmem:[#allocation7 + $0x20] sm:$0xff]
    %v119 = vld [vmem:[#allocation7 + $0x28] sm:$0xff]
    %v120 = vld [vmem:[#allocation7 + $0x30] sm:$0xff]
    %v121 = vld [vmem:[#allocation7 + $0x38] sm:$0xff]
    %v124 = vunpack.c.l.b16 %v112
    %v125 = vunpack.c.l.b16 %v113
    %v126 = vpack.c.b16 %v125, %v124
    %v135 = vunpack.c.l.b16 %v114
    %v136 = vunpack.c.h.b16 %v114
    %v137 = vunpack.c.l.b16 %v115
    %v138 = vunpack.c.h.b16 %v115
    %v139 = vunpack.c.l.b16 %v116
    %v140 = vunpack.c.h.b16 %v116
    %v141 = vunpack.c.l.b16 %v117
    %v142 = vunpack.c.h.b16 %v117
    %v143 = vunpack.c.l.b16 %v118
    %v144 = vunpack.c.h.b16 %v118
    %v145 = vunpack.c.l.b16 %v119
    %v146 = vunpack.c.h.b16 %v119
    %v147 = vunpack.c.l.b16 %v120
    %v148 = vunpack.c.h.b16 %v120
    %v149 = vunpack.c.l.b16 %v121
    %v150 = vunpack.c.h.b16 %v121
    %v151 = vpack.c.b16 %v137, %v135
    %v152 = vpack.c.b16 %v138, %v136
    %v153 = vpack.c.b16 %v141, %v139
    %v154 = vpack.c.b16 %v142, %v140
    %v155 = vpack.c.b16 %v145, %v143
    %v156 = vpack.c.b16 %v146, %v144
    %v157 = vpack.c.b16 %v149, %v147
    %v158 = vpack.c.b16 %v150, %v148
    %vm167 = vcmask 523264
    %v169 = vsel %vm167, %v126, 0
    %171 = vmatprep.subr.bf16.mxu0 %v152
    %172 = vmatpush1.bf16.msra.mxu0 %v151
    %173 = vmatprep.subr.bf16.mxu0 %v154
    %174 = vmatpush1.bf16.msra.mxu0 %v153
    %175 = vmatprep.subr.bf16.mxu0 %v156
    %176 = vmatpush1.bf16.msra.mxu0 %v155
    %177 = vmatprep.subr.bf16.mxu0 %v158
    %178 = vmatpush1.bf16.msra.mxu0 %v157
    %179 = vmatprep.subr.bf16.mxu0 0
    %180 = vmatpush1.bf16.msra.mxu0 0
    %181 = vmatprep.subr.bf16.mxu0 0
    %182 = vmatpush1.bf16.msra.mxu0 0
    %183 = vmatprep.subr.bf16.mxu0 0
    %184 = vmatpush1.bf16.msra.mxu0 0
    %185 = vmatprep.subr.bf16.mxu0 0
    %186 = vmatpush1.bf16.msra.mxu0 0
    %187 = vmatprep.subr.bf16.mxu0 0
    %188 = vmatpush1.bf16.msra.mxu0 0
    %189 = vmatprep.subr.bf16.mxu0 0
    %190 = vmatpush1.bf16.msra.mxu0 0
    %191 = vmatprep.subr.bf16.mxu0 0
    %192 = vmatpush1.bf16.msra.mxu0 0
    %193 = vmatprep.subr.bf16.mxu0 0
    %194 = vmatpush1.bf16.msra.mxu0 0
    %195 = vmatprep.subr.bf16.mxu0 0
    %196 = vmatpush1.bf16.msra.mxu0 0
    %197 = vmatprep.subr.bf16.mxu0 0
    %198 = vmatpush1.bf16.msra.mxu0 0
    %199 = vmatprep.subr.bf16.mxu0 0
    %200 = vmatpush1.bf16.msra.mxu0 0
    %201 = vmatprep.subr.bf16.mxu0 0
    %202 = vmatpush1.bf16.msra.mxu0 0
    %203 = vmatprep.mubr.bf16.mxu0 0
    %204 = vmatmul.mubr.bf16.gmra.mrb[0].mxu0 %v169
    %v205 = vpop.f32.mrb[0].mxu0
    %v206 = vadd.f32 0.0, %v205
    %v207 = vpop.f32.mrb[0].mxu0
    %v208 = vadd.f32 0.0, %v207
    %v209 = vpop.f32.mrb[0].mxu0
    %v210 = vadd.f32 0.0, %v209
    %v211 = vpop.f32.mrb[0].mxu0
    %v212 = vadd.f32 0.0, %v211
    %213 = vdwg.mxu0
    %v214 = vld [vmem:[%s3] sm:$0x1]
    %v216 = vlaneseq
    %v217 = vshrl.u32 %v216, 7
    %v218 = vsub.s32 0, %v217
    %v219 = vrot.slane %v214, %v218
    %v221 = vadd.f32 %v206, %v219
    %v222 = vadd.f32 %v210, %v219
    %v223 = vmax.f32 %v221, 0.0
    %v224 = vmax.f32 %v222, 0.0
    %v225 = vadd.f32 %v223, %v208
    %v226 = vadd.f32 %v224, %v212
    %v227 = vmax.f32 %v225, 0.0
    %v228 = vmax.f32 %v226, 0.0
    %v229 = vpack.c.bf16 %v228, %v227
    %v230 = vld [vmem:[#allocation8] sm:$0xf]
    %v231 = vld [vmem:[#allocation8 + $0x4] sm:$0xf]
    %v232 = vld [vmem:[#allocation8 + $0x8] sm:$0xf]
    %v233 = vld [vmem:[#allocation8 + $0xc] sm:$0xf]
    %v234 = vld [vmem:[#allocation8 + $0x10] sm:$0xf]
    %v235 = vld [vmem:[#allocation8 + $0x14] sm:$0xf]
    %v236 = vld [vmem:[#allocation8 + $0x18] sm:$0xf]
    %v237 = vld [vmem:[#allocation8 + $0x1c] sm:$0xf]
    %v238 = vld [vmem:[#allocation8 + $0x20] sm:$0xf]
    %v239 = vld [vmem:[#allocation8 + $0x24] sm:$0xf]
    %v240 = vld [vmem:[#allocation8 + $0x28] sm:$0xf]
    %v241 = vld [vmem:[#allocation8 + $0x2c] sm:$0xf]
    %v242 = vld [vmem:[#allocation8 + $0x30] sm:$0xf]
    %v243 = vld [vmem:[#allocation8 + $0x34] sm:$0xf]
    %v244 = vld [vmem:[#allocation8 + $0x38] sm:$0xf]
    %v245 = vld [vmem:[#allocation8 + $0x3c] sm:$0xf]
    %v246 = vld [vmem:[%s5] sm:$0x1]
    %v248 = vlaneseq
    %v249 = vshrl.u32 %v248, 7
    %v250 = vsub.s32 0, %v249
    %v251 = vrot.slane %v246, %v250
    %v269 = vunpack.c.l.b16 %v230
    %v270 = vunpack.c.l.b16 %v231
    %v271 = vunpack.c.l.b16 %v232
    %v272 = vunpack.c.l.b16 %v233
    %v273 = vunpack.c.l.b16 %v234
    %v274 = vunpack.c.l.b16 %v235
    %v275 = vunpack.c.l.b16 %v236
    %v276 = vunpack.c.l.b16 %v237
    %v277 = vunpack.c.l.b16 %v238
    %v278 = vunpack.c.l.b16 %v239
    %v279 = vunpack.c.l.b16 %v240
    %v280 = vunpack.c.l.b16 %v241
    %v281 = vunpack.c.l.b16 %v242
    %v282 = vunpack.c.l.b16 %v243
    %v283 = vunpack.c.l.b16 %v244
    %v284 = vunpack.c.l.b16 %v245
    %v285 = vpack.c.b16 %v270, %v269
    %v286 = vpack.c.b16 %v272, %v271
    %v287 = vpack.c.b16 %v274, %v273
    %v288 = vpack.c.b16 %v276, %v275
    %v289 = vpack.c.b16 %v278, %v277
    %v290 = vpack.c.b16 %v280, %v279
    %v291 = vpack.c.b16 %v282, %v281
    %v292 = vpack.c.b16 %v284, %v283
    %301 = vmatprep.subr.bf16.mxu0 0
    %302 = vmatpush1.bf16.msra.mxu0 %v285
    %303 = vmatprep.subr.bf16.mxu0 0
    %304 = vmatpush1.bf16.msra.mxu0 %v286
    %305 = vmatprep.subr.bf16.mxu0 0
    %306 = vmatpush1.bf16.msra.mxu0 %v287
    %307 = vmatprep.subr.bf16.mxu0 0
    %308 = vmatpush1.bf16.msra.mxu0 %v288
    %309 = vmatprep.subr.bf16.mxu0 0
    %310 = vmatpush1.bf16.msra.mxu0 %v289
    %311 = vmatprep.subr.bf16.mxu0 0
    %312 = vmatpush1.bf16.msra.mxu0 %v290
    %313 = vmatprep.subr.bf16.mxu0 0
    %314 = vmatpush1.bf16.msra.mxu0 %v291
    %315 = vmatprep.subr.bf16.mxu0 0
    %316 = vmatpush1.bf16.msra.mxu0 %v292
    %317 = vmatprep.subr.bf16.mxu0 0
    %318 = vmatpush1.bf16.msra.mxu0 0
    %319 = vmatprep.subr.bf16.mxu0 0
    %320 = vmatpush1.bf16.msra.mxu0 0
    %321 = vmatprep.subr.bf16.mxu0 0
    %322 = vmatpush1.bf16.msra.mxu0 0
    %323 = vmatprep.subr.bf16.mxu0 0
    %324 = vmatpush1.bf16.msra.mxu0 0
    %325 = vmatprep.subr.bf16.mxu0 0
    %326 = vmatpush1.bf16.msra.mxu0 0
    %327 = vmatprep.subr.bf16.mxu0 0
    %328 = vmatpush1.bf16.msra.mxu0 0
    %329 = vmatprep.subr.bf16.mxu0 0
    %330 = vmatpush1.bf16.msra.mxu0 0
    %331 = vmatprep.subr.bf16.mxu0 0
    %332 = vmatpush1.bf16.msra.mxu0 0
    %333 = vmatprep.mubr.bf16.mxu0 0
    %334 = vmatmul.mubr.bf16.gmra.mrb[0].mxu0 %v229
    %v335 = vpop.f32.mrb[0].mxu0
    %v336 = vadd.f32 %v251, %v335
    %v337 = vpop.f32.mrb[0].mxu0
    %v338 = vpop.f32.mrb[0].mxu0
    %v339 = vadd.f32 %v251, %v338
    %v340 = vpop.f32.mrb[0].mxu0
    %341 = vdwg.mxu0
    %v342 = vmax.f32 %v336, 0.0
    %v343 = vmax.f32 %v339, 0.0
    %v344 = vadd.f32 %v342, %v227
    %v345 = vadd.f32 %v343, %v228
    %v346 = vmax.f32 %v344, 0.0
    %v347 = vmax.f32 %v345, 0.0
    %348 = vadd.xlane.f32.xlu0 %v346
    %v349 = vpop.xlane.xlu0 %348
    %350 = vadd.xlane.f32.xlu0 %v347
    %v351 = vpop.xlane.xlu0 %350
    %v352 = vrcp.pop 128.0
    %v353 = vmul.f32 %v349, %v352
    %v354 = vmul.f32 %v351, %v352
    %v355 = vsub.f32 %v346, %v353
    %v356 = vsub.f32 %v347, %v354
    %v357 = vmul.f32 %v355, %v355
    %v358 = vmul.f32 %v356, %v356
    %359 = vadd.xlane.f32.xlu0 %v357
    %v360 = vpop.xlane.xlu0 %359
    %361 = vadd.xlane.f32.xlu0 %v358
    %v362 = vpop.xlane.xlu0 %361
    %v363 = vmul.f32 %v360, %v352
    %v364 = vmul.f32 %v362, %v352
    %v365 = vadd.f32 %v363, 1e-06
    %v366 = vadd.f32 %v364, 1e-06
    %v367 = vrsqrt.pop %v365
    %v368 = vrsqrt.pop %v366
    %v369 = vmul.f32 %v355, %v367
    %v370 = vmul.f32 %v356, %v368
    %v371 = vld [vmem:[%s6] sm:$0x1]
    %v373 = vlaneseq
    %v374 = vshrl.u32 %v373, 7
    %v375 = vsub.s32 0, %v374
    %v376 = vrot.slane %v371, %v375
    %v378 = vmul.f32 %v369, %v376
    %v379 = vmul.f32 %v370, %v376
    %v380 = vld [vmem:[%s7] sm:$0x1]
    %v382 = vlaneseq
    %v383 = vshrl.u32 %v382, 7
    %v384 = vsub.s32 0, %v383
    %v385 = vrot.slane %v380, %v384
    %v387 = vadd.f32 %v378, %v385
    %v388 = vadd.f32 %v379, %v385
    %v389 = vmax.f32 %v387, 0.0
    %v390 = vmax.f32 %v388, 0.0
    %v391 = vld [vmem:[#allocation5] sm:$0xff]
    %v392 = vld [vmem:[#allocation5 + $0x8] sm:$0xff]
    %v393 = vadd.f32 %v389, %v391
    %v394 = vadd.f32 %v390, %v392
    %395 = vst [vmem:[#allocation11] sm:$0xff] %v393
    %396 = vst [vmem:[#allocation11 + $0x8] sm:$0xff] %v394
    %v397 = vmul.f32 %v393, %v393
    %v398 = vmul.f32 %v394, %v394
    %399 = vadd.xlane.f32.xlu0 %v397
    %v400 = vpop.xlane.xlu0 %399
    %401 = vadd.xlane.f32.xlu0 %v398
    %v402 = vpop.xlane.xlu0 %401
    %v403 = vmax.f32 %v400, 1e-24
    %v404 = vmax.f32 %v402, 1e-24
    %v405 = vrsqrt.pop %v403
    %v406 = vrsqrt.pop %v404
    %v407 = vmul.f32 %v393, %v405
    %v408 = vmul.f32 %v394, %v406
    %v409 = vpack.c.bf16 %v408, %v407
    %v411 = vunpack.c.l.b16 %v409
    %v412 = vunpack.c.h.b16 %v409
    %v413 = vpack.c.b16 %v411, %v411
    %v414 = vpack.c.b16 %v412, %v412
    %417 = vst [vmem:[#allocation12] sm:$0xf] %v413
    %418 = vst [vmem:[#allocation12 + $0x4] sm:$0xf] %v414
    %v419 = vpack.c.bf16 %v394, %v393
    %v420 = vld [vmem:[#allocation10] sm:$0xf]
    %v421 = vld [vmem:[#allocation10 + $0x4] sm:$0xf]
    %v422 = vld [vmem:[#allocation10 + $0x8] sm:$0xf]
    %v423 = vld [vmem:[#allocation10 + $0xc] sm:$0xf]
    %v424 = vld [vmem:[#allocation10 + $0x10] sm:$0xf]
    %v425 = vld [vmem:[#allocation10 + $0x14] sm:$0xf]
    %v426 = vld [vmem:[#allocation10 + $0x18] sm:$0xf]
    %v427 = vld [vmem:[#allocation10 + $0x1c] sm:$0xf]
    %v428 = vld [vmem:[#allocation10 + $0x20] sm:$0xf]
    %v429 = vld [vmem:[#allocation10 + $0x24] sm:$0xf]
    %v430 = vld [vmem:[#allocation10 + $0x28] sm:$0xf]
    %v431 = vld [vmem:[#allocation10 + $0x2c] sm:$0xf]
    %v432 = vld [vmem:[#allocation10 + $0x30] sm:$0xf]
    %v433 = vld [vmem:[#allocation10 + $0x34] sm:$0xf]
    %v434 = vld [vmem:[#allocation10 + $0x38] sm:$0xf]
    %v435 = vld [vmem:[#allocation10 + $0x3c] sm:$0xf]
    %v436 = vld [vmem:[%s9] sm:$0x1]
    %v438 = vlaneseq
    %v439 = vshrl.u32 %v438, 7
    %v440 = vsub.s32 0, %v439
    %v441 = vrot.slane %v436, %v440
    %v459 = vunpack.c.l.b16 %v420
    %v460 = vunpack.c.l.b16 %v421
    %v461 = vunpack.c.l.b16 %v422
    %v462 = vunpack.c.l.b16 %v423
    %v463 = vunpack.c.l.b16 %v424
    %v464 = vunpack.c.l.b16 %v425
    %v465 = vunpack.c.l.b16 %v426
    %v466 = vunpack.c.l.b16 %v427
    %v467 = vunpack.c.l.b16 %v428
    %v468 = vunpack.c.l.b16 %v429
    %v469 = vunpack.c.l.b16 %v430
    %v470 = vunpack.c.l.b16 %v431
    %v471 = vunpack.c.l.b16 %v432
    %v472 = vunpack.c.l.b16 %v433
    %v473 = vunpack.c.l.b16 %v434
    %v474 = vunpack.c.l.b16 %v435
    %v475 = vpack.c.b16 %v460, %v459
    %v476 = vpack.c.b16 %v462, %v461
    %v477 = vpack.c.b16 %v464, %v463
    %v478 = vpack.c.b16 %v466, %v465
    %v479 = vpack.c.b16 %v468, %v467
    %v480 = vpack.c.b16 %v470, %v469
    %v481 = vpack.c.b16 %v472, %v471
    %v482 = vpack.c.b16 %v474, %v473
    %491 = vmatprep.subr.bf16.mxu0 0
    %492 = vmatpush1.bf16.msra.mxu0 %v475
    %493 = vmatprep.subr.bf16.mxu0 0
    %494 = vmatpush1.bf16.msra.mxu0 %v476
    %495 = vmatprep.subr.bf16.mxu0 0
    %496 = vmatpush1.bf16.msra.mxu0 %v477
    %497 = vmatprep.subr.bf16.mxu0 0
    %498 = vmatpush1.bf16.msra.mxu0 %v478
    %499 = vmatprep.subr.bf16.mxu0 0
    %500 = vmatpush1.bf16.msra.mxu0 %v479
    %501 = vmatprep.subr.bf16.mxu0 0
    %502 = vmatpush1.bf16.msra.mxu0 %v480
    %503 = vmatprep.subr.bf16.mxu0 0
    %504 = vmatpush1.bf16.msra.mxu0 %v481
    %505 = vmatprep.subr.bf16.mxu0 0
    %506 = vmatpush1.bf16.msra.mxu0 %v482
    %507 = vmatprep.subr.bf16.mxu0 0
    %508 = vmatpush1.bf16.msra.mxu0 0
    %509 = vmatprep.subr.bf16.mxu0 0
    %510 = vmatpush1.bf16.msra.mxu0 0
    %511 = vmatprep.subr.bf16.mxu0 0
    %512 = vmatpush1.bf16.msra.mxu0 0
    %513 = vmatprep.subr.bf16.mxu0 0
    %514 = vmatpush1.bf16.msra.mxu0 0
    %515 = vmatprep.subr.bf16.mxu0 0
    %516 = vmatpush1.bf16.msra.mxu0 0
    %517 = vmatprep.subr.bf16.mxu0 0
    %518 = vmatpush1.bf16.msra.mxu0 0
    %519 = vmatprep.subr.bf16.mxu0 0
    %520 = vmatpush1.bf16.msra.mxu0 0
    %521 = vmatprep.subr.bf16.mxu0 0
    %522 = vmatpush1.bf16.msra.mxu0 0
    %523 = vmatprep.mubr.bf16.mxu0 0
    %524 = vmatmul.mubr.bf16.gmra.mrb[0].mxu0 %v419
    %v525 = vpop.f32.mrb[0].mxu0
    %v526 = vadd.f32 %v441, %v525
    %v527 = vpop.f32.mrb[0].mxu0
    %v528 = vpop.f32.mrb[0].mxu0
    %v529 = vadd.f32 %v441, %v528
    %v530 = vpop.f32.mrb[0].mxu0
    %531 = vdwg.mxu0
    %v532 = vpack.c.bf16 %v529, %v526
    %v534 = vunpack.c.l.b16 %v532
    %v535 = vunpack.c.h.b16 %v532
    %v536 = vpack.c.b16 %v534, %v534
    %v537 = vpack.c.b16 %v535, %v535
    %540 = vst [vmem:[#allocation14] sm:$0xf] %v536
    %541 = vst [vmem:[#allocation14 + $0x4] sm:$0xf] %v537
    %542 = vmax.xlane.f32.xlu0 %v526
    %v543 = vpop.xlane.xlu0 %542
    %544 = vmax.xlane.f32.xlu0 %v529
    %v545 = vpop.xlane.xlu0 %544
    %v546 = vsub.f32 %v526, %v543
    %v547 = vsub.f32 %v529, %v545
    %v548 = vmul.f32 %v546, 1.442695
    %v549 = vpow.pop %v548
    %v550 = vmul.f32 %v547, 1.442695
    %v551 = vpow.pop %v550
    %552 = vadd.xlane.f32.xlu0 %v549
    %v553 = vpop.xlane.xlu0 %552
    %554 = vadd.xlane.f32.xlu0 %v551
    %v555 = vpop.xlane.xlu0 %554
    %v556 = vlog2.pop %v553
    %v557 = vmul.f32 %v556, 0.6931472
    %v558 = vlog2.pop %v555
    %v559 = vmul.f32 %v558, 0.6931472
    %v560 = vsub.f32 %v546, %v557
    %v561 = vsub.f32 %v547, %v559
    %562 = vst [vmem:[#allocation15] sm:$0xff] %v560
    %563 = vst [vmem:[#allocation15 + $0x8] sm:$0xff] %v561
    %v564 = vrcp.pop %v553
    %v565 = vrcp.pop %v555
    %v566 = vmul.f32 %v549, %v564
    %v567 = vmul.f32 %v551, %v565
    %v568 = vpack.c.bf16 %v567, %v566
    %v570 = vunpack.c.l.b16 %v568
    %v571 = vunpack.c.h.b16 %v568
    %v572 = vpack.c.b16 %v570, %v570
    %v573 = vpack.c.b16 %v571, %v571
    %576 = vst [vmem:[#allocation17] sm:$0xf] %v572
    %577 = vst [vmem:[#allocation17 + $0x4] sm:$0xf] %v573
    // Predicated region
    $region62: #{tpu_custom_call.1} parent=1 // pred_check
      _
    $region63: #{tpu_custom_call.1} parent=1 // pred_check_branch
      %579 = sbr.rel (0) target = $region65
    $region64: #{tpu_custom_call.1} parent=1 // pred_region
      %s581 = ssub.s32 256, 256
      %582 = vsyncadd [#allocation4], %s581
      %s583 = sshll.u32 [#allocation11], 4
      %s584 = int_to_ptr.vmem [resolvable:$true] %s583
      %589 = dma.vmem_to_hbm [thread:$0]  %s584, 256, %s10, [#allocation4], 128, 128, 8
    $region65: #{tpu_custom_call.1} parent=1 // pred_fallthru
      _
    // Predicated region
    $region66: #{tpu_custom_call.1} parent=1 // pred_check
      _
    $region67: #{tpu_custom_call.1} parent=1 // pred_check_branch
      %591 = sbr.rel (0) target = $region69
    $region68: #{tpu_custom_call.1} parent=1 // pred_region
      %s593 = ssub.s32 128, 128
      %594 = vsyncadd [#allocation13], %s593
      %s595 = sshll.u32 [#allocation12], 4
      %s596 = int_to_ptr.vmem [resolvable:$true] %s595
      %601 = dma.vmem_to_hbm [thread:$0]  %s596, 128, %s11, [#allocation13], 64, 64, 4
    $region69: #{tpu_custom_call.1} parent=1 // pred_fallthru
      _
    // Predicated region
    $region70: #{tpu_custom_call.1} parent=1 // pred_check
      _
    $region71: #{tpu_custom_call.1} parent=1 // pred_check_branch
      %603 = sbr.rel (0) target = $region73
    $region72: #{tpu_custom_call.1} parent=1 // pred_region
      %s605 = ssub.s32 128, 128
      %606 = vsyncadd [#allocation13], %s605
      %s607 = sshll.u32 [#allocation14], 4
      %s608 = int_to_ptr.vmem [resolvable:$true] %s607
      %613 = dma.vmem_to_hbm [thread:$0]  %s608, 128, %s12, [#allocation13], 64, 64, 4
    $region73: #{tpu_custom_call.1} parent=1 // pred_fallthru
      _
    // Predicated region
    $region74: #{tpu_custom_call.1} parent=1 // pred_check
      _
    $region75: #{tpu_custom_call.1} parent=1 // pred_check_branch
      %615 = sbr.rel (0) target = $region77
    $region76: #{tpu_custom_call.1} parent=1 // pred_region
      %s617 = ssub.s32 256, 256
      %618 = vsyncadd [#allocation16], %s617
      %s619 = sshll.u32 [#allocation15], 4
      %s620 = int_to_ptr.vmem [resolvable:$true] %s619
      %625 = dma.vmem_to_hbm [thread:$0]  %s620, 256, %s13, [#allocation16], 128, 128, 8
    $region77: #{tpu_custom_call.1} parent=1 // pred_fallthru
      _
    // Predicated region
    $region78: #{tpu_custom_call.1} parent=1 // pred_check
      _
    $region79: #{tpu_custom_call.1} parent=1 // pred_check_branch
      %627 = sbr.rel (0) target = $region81
    $region80: #{tpu_custom_call.1} parent=1 // pred_region
      %s629 = ssub.s32 128, 128
      %630 = vsyncadd [#allocation16], %s629
      %s631 = sshll.u32 [#allocation17], 4
      %s632 = int_to_ptr.vmem [resolvable:$true] %s631
      %637 = dma.vmem_to_hbm [thread:$0]  %s632, 128, %s14, [#allocation16], 64, 64, 4
    $region81: #{tpu_custom_call.1} parent=1 // pred_fallthru
      _
    // Predicated region
    $region82: #{tpu_custom_call.1} parent=1 // pred_check
      _
    $region83: #{tpu_custom_call.1} parent=1 // pred_check_branch
      %639 = sbr.rel (0) target = $region85
    $region84: #{tpu_custom_call.1} parent=1 // pred_region
      %640 = dma.done [#allocation4], 256
    $region85: #{tpu_custom_call.1} parent=1 // pred_fallthru
      _
    // Predicated region
    $region86: #{tpu_custom_call.1} parent=1 // pred_check
      _
    $region87: #{tpu_custom_call.1} parent=1 // pred_check_branch
      %642 = sbr.rel (0) target = $region89
    $region88: #{tpu_custom_call.1} parent=1 // pred_region
      %643 = dma.done [#allocation13], 128
    $region89: #{tpu_custom_call.1} parent=1 // pred_fallthru
      _
    // Predicated region
    $region90: #{tpu_custom_call.1} parent=1 // pred_check
      _
    $region91: #{tpu_custom_call.1} parent=1 // pred_check_branch
      %645 = sbr.rel (0) target = $region93
    $region92: #{tpu_custom_call.1} parent=1 // pred_region
      %646 = dma.done [#allocation13], 128
    $region93: #{tpu_custom_call.1} parent=1 // pred_fallthru
      _
    // Predicated region
    $region94: #{tpu_custom_call.1} parent=1 // pred_check
      _
    $region95: #{tpu_custom_call.1} parent=1 // pred_check_branch
      %648 = sbr.rel (0) target = $region97
    $region96: #{tpu_custom_call.1} parent=1 // pred_region
      %649 = dma.done [#allocation16], 256
    $region97: #{tpu_custom_call.1} parent=1 // pred_fallthru
      _
    // Predicated region
    $region98: #{tpu_custom_call.1} parent=1 // pred_check
      _
    $region99: #{tpu_custom_call.1} parent=1 // pred_check_branch
      %651 = sbr.rel (0) target = $region101
    $region100: #{tpu_custom_call.1} parent=1 // pred_region
      %652 = dma.done [#allocation16], 128
    $region101: #{tpu_custom_call.1} parent=1 // pred_fallthru
      _
    %653 = vsyncpa [#allocation3], 1
    %654 = vsyncpa [#allocation6], 1
    %655 = vsyncpa [#allocation9], 1
    %656 = vsyncpa [#allocation4], 1
    %657 = vsyncpa [#allocation13], 1
    %658 = vsyncpa [#allocation16], 1

</llo_original>
